<compile_context>
chip_gen: v5e
topology: v5e:2x2
jax: 0.10.0
libtpu: 0.0.40
codegen_flags: <defaults>
</compile_context>

<pallas_src>
import functools

import jax
import jax.numpy as jnp
import numpy as np
from jax.experimental import pallas as pl
from jax.experimental.pallas import tpu as pltpu


def _basic_block_kernel(x_ref, w1_ref, b1_ref, w2_ref, b2_ref, o_ref,
                        *, Nb, H, W, Cin, Cout):
    # x_ref : (Nb, H, W*Cin)        lane-dense activations, Nb batch elements
    # w1_ref: (3*W*Cin,  W*Cout)    bf16 block-banded conv1 weights (BN1 scale folded)
    # b1_ref: (1, W*Cout)           f32 folded BN1 bias (tiled over W)
    # w2_ref: (3*W*Cout, W*Cout)    bf16 block-banded conv2 weights (BN2 scale folded)
    # b2_ref: (1, W*Cout)           f32 folded BN2 bias (tiled over W)
    # o_ref : (Nb, H, W*Cout)       lane-dense output
    x = x_ref[...]                                          # (Nb, H, W*Cin)

    def im2col(a, c):
        # a: (Nb, H, W*c).  Build the three dy taps as row-shifted copies of
        # `a` (zero rows at the batch-element borders), concatenate along the
        # lane axis (each slab is exactly W*c = 128-aligned lanes), and
        # collapse the leading dims -> (Nb*H, 3*W*c).  No column halo: the
        # q=-1 / q=W taps are omitted from the packed weight instead.
        zrow = jnp.zeros((Nb, 1, W * c), a.dtype)
        up = jnp.concatenate([zrow, a[:, :H - 1, :]], axis=1)    # row h-1
        dn = jnp.concatenate([a[:, 1:, :], zrow], axis=1)        # row h+1
        return jnp.concatenate([up, a, dn], axis=2).reshape(Nb * H, 3 * W * c)

    # ---- conv1 (+ folded bn1 scale) : one big-K MXU matmul, bf16 in / f32 acc
    p1 = im2col(x, Cin).astype(jnp.bfloat16)                # (Nb*H, 3*W*Cin)
    acc1 = jnp.dot(p1, w1_ref[...], preferred_element_type=jnp.float32)
    y = jnp.maximum(acc1 + b1_ref[...], 0.0)                # bn1 bias + relu

    # ---- conv2 (+ folded bn2 scale) + bias
    p2 = im2col(y.reshape(Nb, H, W * Cout), Cout).astype(jnp.bfloat16)
    acc2 = jnp.dot(p2, w2_ref[...], preferred_element_type=jnp.float32)
    z = acc2 + b2_ref[...]

    # ---- residual add + relu (f32, same lane-dense layout as the output)
    res = x.reshape(Nb * H, W * Cin).astype(jnp.float32)
    out = jnp.maximum(z + res, 0.0).reshape(Nb, H, W * Cout)
    o_ref[...] = out.astype(o_ref.dtype)


def _pack_conv_weight(w, Wsp, scale=None):
    """PyTorch conv weight (Cout, Cin, 3, 3) -> block-banded matmul matrix
    M of shape (3*Wsp*Cin, Wsp*Cout) with
      M[dy*Wsp*Cin + q*Cin + ci, w*Cout + co] = scale[co]*w[co, ci, dy, q-w+1]
    for 0 <= q-w+1 <= 2 (zero elsewhere).  Then, with p = im2col (no column
    halo, three dy row-shifted slabs):  conv3x3(x)[h, w*Cout+co] = p[h] @ M.
    NOTE: footprint is O(Wsp^2 * Cin * Cout); tile over W for production
    ResNet widths (exceeds v7x 64 MiB VMEM at W=56, C>=64)."""
    Cout, Cin = int(w.shape[0]), int(w.shape[1])
    w = w.astype(jnp.float32)
    if scale is not None:
        w = w * scale.astype(jnp.float32)[:, None, None, None]
    wt = jnp.transpose(w, (2, 3, 1, 0))                  # (dy, dx, Cin, Cout)
    sel = np.zeros((3, Wsp, Wsp), np.float32)            # sel[dx, w, q]
    for dx in range(3):
        for wcol in range(Wsp):
            q = wcol + dx - 1
            if 0 <= q < Wsp:
                sel[dx, wcol, q] = 1.0
    m = jnp.einsum('dwq,kdio->kqiwo', jnp.asarray(sel), wt)
    return m.reshape(3 * Wsp * Cin, Wsp * Cout)


def _choose_nb(N, H, target_rows=256):
    """Pick batch-per-step Nb so the matmul M = Nb*H approaches the MXU row
    count, Nb divides N, and (when compatible with M >= 128) the grid keeps
    >= 2 parallel steps for v7x's two TensorCores."""
    nb = max(1, min(N, max(1, target_rows // max(H, 1))))
    while N % nb:
        nb -= 1
    if N // nb < 2:                      # try to keep 2+ grid steps (v7x)
        cand = nb - 1
        while cand >= 1:
            if N % cand == 0 and cand * H >= 128 and N // cand >= 2:
                nb = cand
                break
            cand -= 1
    return nb


def basic_block_pallas(x_nchw, w1, w2, bn1, bn2, eps=1e-5,
                       act_dtype=jnp.float32):
    """x_nchw: (N, C, H, W); w1/w2: (C, C, 3, 3) PyTorch conv weights;
    bn*: dict with gamma, beta, mean, var each of shape (C,).
    act_dtype=jnp.bfloat16 halves activation HBM traffic (recommended on v5e)."""
    N, Cin, H, W = x_nchw.shape
    Cout = w1.shape[0]
    assert Cin == Cout, "BasicBlock without downsample requires inplanes == planes"

    # NCHW -> lane-dense (N, H, W*C); single layout pass, no host-side pad.
    x_l = jnp.transpose(x_nchw, (0, 2, 3, 1)).reshape(N, H, W * Cin)
    x_l = x_l.astype(act_dtype)

    # Fold BatchNorm (inference form): scale goes into the packed conv
    # weights (in f32, before the bf16 cast); bias stays as the epilogue add.
    def fold_bn(bn):
        scale = bn["gamma"] / jnp.sqrt(bn["var"] + eps)           # (C,)
        bias = bn["beta"] - bn["mean"] * scale                    # (C,)
        return scale, jnp.tile(bias, W).reshape(1, W * Cout).astype(jnp.float32)

    s1, b1 = fold_bn(bn1)
    s2, b2 = fold_bn(bn2)

    w1_m = _pack_conv_weight(w1, W, scale=s1).astype(jnp.bfloat16)
    w2_m = _pack_conv_weight(w2, W, scale=s2).astype(jnp.bfloat16)

    Nb = _choose_nb(N, H)
    grid = (N // Nb,)

    kernel = functools.partial(_basic_block_kernel,
                               Nb=Nb, H=H, W=W, Cin=Cin, Cout=Cout)
    const2 = lambda arr: pl.BlockSpec(arr.shape, lambda n: (0, 0))

    # Advisory cost estimate: 2*M*K*N flops per conv + small epilogue.
    K1, K2, Ncol = 3 * W * Cin, 3 * W * Cout, W * Cout
    flops = 2 * N * H * Ncol * (K1 + K2) + 6 * N * H * Ncol
    bytes_accessed = (x_l.size * x_l.dtype.itemsize
                      + w1_m.size * 2 + w2_m.size * 2
                      + (b1.size + b2.size) * 4
                      + N * H * Ncol * jnp.dtype(act_dtype).itemsize)

    out_l = pl.pallas_call(
        kernel,
        out_shape=jax.ShapeDtypeStruct((N, H, W * Cout), act_dtype),
        grid=grid,
        in_specs=[
            pl.BlockSpec((Nb, H, W * Cin), lambda n: (n, 0, 0)),
            const2(w1_m), const2(b1),
            const2(w2_m), const2(b2),
        ],
        out_specs=pl.BlockSpec((Nb, H, W * Cout), lambda n: (n, 0, 0)),
        compiler_params=pltpu.CompilerParams(
            dimension_semantics=("parallel",)),
        cost_estimate=pl.CostEstimate(flops=int(flops), transcendentals=0,
                                      bytes_accessed=int(bytes_accessed)),
    )(x_l, w1_m, b1, w2_m, b2)

    # lane-dense -> NCHW to match the PyTorch output convention.
    out_l = out_l.astype(jnp.float32)
    return jnp.transpose(out_l.reshape(N, H, W, Cout), (0, 3, 1, 2))


def _reference(x_nchw, w1, w2, bn1, bn2, eps=1e-5):
    """Pure-JAX f32 reference (lax conv) matching the PyTorch BasicBlock."""
    dn = jax.lax.conv_dimension_numbers(x_nchw.shape, w1.shape,
                                        ("NCHW", "OIHW", "NCHW"))

    def conv(x, w):
        return jax.lax.conv_general_dilated(x, w, (1, 1), ((1, 1), (1, 1)),
                                            dimension_numbers=dn)

    def bn(x, p):
        sc = (p["gamma"] / jnp.sqrt(p["var"] + eps)).reshape(1, -1, 1, 1)
        bi = (p["beta"] - p["mean"] * p["gamma"] /
              jnp.sqrt(p["var"] + eps)).reshape(1, -1, 1, 1)
        return x * sc + bi

    out = jnp.maximum(bn(conv(x_nchw, w1), bn1), 0.0)
    out = bn(conv(out, w2), bn2)
    return jnp.maximum(out + x_nchw, 0.0)


if __name__ == "__main__":
    key = jax.random.PRNGKey(0)
    k = jax.random.split(key, 8)

    N, C, H, W = 2, 8, 16, 16  # inplanes == planes, stride=1, no downsample

    x = jax.random.normal(k[0], (N, C, H, W), jnp.float32)
    w1 = jax.random.normal(k[1], (C, C, 3, 3), jnp.float32) * 0.1
    w2 = jax.random.normal(k[2], (C, C, 3, 3), jnp.float32) * 0.1
    bn1 = {
        "gamma": jax.random.uniform(k[3], (C,), jnp.float32, 0.5, 1.5),
        "beta": jax.random.normal(k[4], (C,), jnp.float32) * 0.1,
        "mean": jax.random.normal(k[5], (C,), jnp.float32) * 0.1,
        "var": jax.random.uniform(k[6], (C,), jnp.float32, 0.5, 1.5),
    }
    bn2 = {
        "gamma": jnp.ones((C,), jnp.float32),
        "beta": jnp.zeros((C,), jnp.float32),
        "mean": jax.random.normal(k[7], (C,), jnp.float32) * 0.1,
        "var": jnp.ones((C,), jnp.float32),
    }

    out = basic_block_pallas(x, w1, w2, bn1, bn2)
    out = jax.block_until_ready(out)

    ref = jax.block_until_ready(_reference(x, w1, w2, bn1, bn2))
    # bf16 MXU inputs with f32 accumulation -> slightly loosened tolerance.
    np.testing.assert_allclose(np.asarray(out), np.asarray(ref),
                               rtol=5e-2, atol=5e-2)
    print("KERNEL_OK")
</pallas_src>

<mosaic_0001>
module attributes {stable_mosaic.version = 11 : i64} {
  func.func @_basic_block_kernel(%arg0: i32, %arg1: memref<2x16x128xf32, #tpu.memory_space<vmem>>, %arg2: memref<384x128xbf16, #tpu.memory_space<vmem>>, %arg3: memref<1x128xf32, #tpu.memory_space<vmem>>, %arg4: memref<384x128xbf16, #tpu.memory_space<vmem>>, %arg5: memref<1x128xf32, #tpu.memory_space<vmem>>, %arg6: memref<2x16x128xf32, #tpu.memory_space<vmem>>) attributes {dimension_semantics = [#tpu.dimension_semantics<parallel>], iteration_bounds = array<i64: 1>, scalar_prefetch = 0 : i64, scratch_operands = 0 : i64, tpu.core_type = #tpu.core_type<tc>, window_params = [{transform_indices = @transform_0, window_bounds = array<i64: 2, 16, 128>}, {pipeline_mode = #tpu.pipeline_mode<synchronous>, transform_indices = @transform_1, window_bounds = array<i64: 384, 128>}, {pipeline_mode = #tpu.pipeline_mode<synchronous>, transform_indices = @transform_2, window_bounds = array<i64: 1, 128>}, {pipeline_mode = #tpu.pipeline_mode<synchronous>, transform_indices = @transform_3, window_bounds = array<i64: 384, 128>}, {pipeline_mode = #tpu.pipeline_mode<synchronous>, transform_indices = @transform_4, window_bounds = array<i64: 1, 128>}, {transform_indices = @transform_5, window_bounds = array<i64: 2, 16, 128>}]} {
    %c0 = arith.constant 0 : index
    %c0_0 = arith.constant 0 : index
    %c0_1 = arith.constant 0 : index
    %0 = vector.load %arg1[%c0, %c0_0, %c0_1] : memref<2x16x128xf32, #tpu.memory_space<vmem>>, vector<2x16x128xf32>
    %cst = arith.constant 0.000000e+00 : f32
    %1 = vector.broadcast %cst : f32 to vector<2x1x128xf32>
    %2 = vector.extract_strided_slice %0 {offsets = [0, 0, 0], sizes = [2, 15, 128], strides = [1, 1, 1]} : vector<2x16x128xf32> to vector<2x15x128xf32>
    %3 = tpu.concatenate %1, %2 in 1 : vector<2x1x128xf32>, vector<2x15x128xf32> -> vector<2x16x128xf32>
    %4 = vector.extract_strided_slice %0 {offsets = [0, 1, 0], sizes = [2, 15, 128], strides = [1, 1, 1]} : vector<2x16x128xf32> to vector<2x15x128xf32>
    %5 = tpu.concatenate %4, %1 in 1 : vector<2x15x128xf32>, vector<2x1x128xf32> -> vector<2x16x128xf32>
    %6 = tpu.concatenate %3, %0, %5 in 2 : vector<2x16x128xf32>, vector<2x16x128xf32>, vector<2x16x128xf32> -> vector<2x16x384xf32>
    %7 = vector.shape_cast %6 : vector<2x16x384xf32> to vector<32x384xf32>
    %8 = arith.truncf %7 : vector<32x384xf32> to vector<32x384xbf16>
    %c0_2 = arith.constant 0 : index
    %c0_3 = arith.constant 0 : index
    %9 = vector.load %arg2[%c0_2, %c0_3] : memref<384x128xbf16, #tpu.memory_space<vmem>>, vector<384x128xbf16>
    %cst_4 = arith.constant dense<0.000000e+00> : vector<32x128xf32>
    %10 = tpu.matmul %8, %9, %cst_4 {dimension_numbers = #tpu.dot_dimension_numbers<[1], [0], [0], [1], [0, 0, 1, 1], [], []>} : vector<32x384xbf16>, vector<384x128xbf16>, vector<32x128xf32> -> vector<32x128xf32>
    %c0_5 = arith.constant 0 : index
    %c0_6 = arith.constant 0 : index
    %11 = vector.load %arg3[%c0_5, %c0_6] : memref<1x128xf32, #tpu.memory_space<vmem>>, vector<1x128xf32>
    %12 = vector.broadcast %11 : vector<1x128xf32> to vector<32x128xf32>
    %13 = arith.addf %10, %12 : vector<32x128xf32>
    %cst_7 = arith.constant 0.000000e+00 : f32
    %14 = vector.broadcast %cst_7 : f32 to vector<32x128xf32>
    %15 = arith.maximumf %13, %14 : vector<32x128xf32>
    %16 = vector.shape_cast %15 : vector<32x128xf32> to vector<2x16x128xf32>
    %cst_8 = arith.constant 0.000000e+00 : f32
    %17 = vector.broadcast %cst_8 : f32 to vector<2x1x128xf32>
    %18 = vector.extract_strided_slice %16 {offsets = [0, 0, 0], sizes = [2, 15, 128], strides = [1, 1, 1]} : vector<2x16x128xf32> to vector<2x15x128xf32>
    %19 = tpu.concatenate %17, %18 in 1 : vector<2x1x128xf32>, vector<2x15x128xf32> -> vector<2x16x128xf32>
    %20 = vector.extract_strided_slice %16 {offsets = [0, 1, 0], sizes = [2, 15, 128], strides = [1, 1, 1]} : vector<2x16x128xf32> to vector<2x15x128xf32>
    %21 = tpu.concatenate %20, %17 in 1 : vector<2x15x128xf32>, vector<2x1x128xf32> -> vector<2x16x128xf32>
    %22 = tpu.concatenate %19, %16, %21 in 2 : vector<2x16x128xf32>, vector<2x16x128xf32>, vector<2x16x128xf32> -> vector<2x16x384xf32>
    %23 = vector.shape_cast %22 : vector<2x16x384xf32> to vector<32x384xf32>
    %24 = arith.truncf %23 : vector<32x384xf32> to vector<32x384xbf16>
    %c0_9 = arith.constant 0 : index
    %c0_10 = arith.constant 0 : index
    %25 = vector.load %arg4[%c0_9, %c0_10] : memref<384x128xbf16, #tpu.memory_space<vmem>>, vector<384x128xbf16>
    %cst_11 = arith.constant dense<0.000000e+00> : vector<32x128xf32>
    %26 = tpu.matmul %24, %25, %cst_11 {dimension_numbers = #tpu.dot_dimension_numbers<[1], [0], [0], [1], [0, 0, 1, 1], [], []>} : vector<32x384xbf16>, vector<384x128xbf16>, vector<32x128xf32> -> vector<32x128xf32>
    %c0_12 = arith.constant 0 : index
    %c0_13 = arith.constant 0 : index
    %27 = vector.load %arg5[%c0_12, %c0_13] : memref<1x128xf32, #tpu.memory_space<vmem>>, vector<1x128xf32>
    %28 = vector.broadcast %27 : vector<1x128xf32> to vector<32x128xf32>
    %29 = arith.addf %26, %28 : vector<32x128xf32>
    %30 = vector.shape_cast %0 : vector<2x16x128xf32> to vector<32x128xf32>
    %31 = arith.addf %29, %30 : vector<32x128xf32>
    %cst_14 = arith.constant 0.000000e+00 : f32
    %32 = vector.broadcast %cst_14 : f32 to vector<32x128xf32>
    %33 = arith.maximumf %31, %32 : vector<32x128xf32>
    %34 = vector.shape_cast %33 : vector<32x128xf32> to vector<2x16x128xf32>
    %c0_15 = arith.constant 0 : index
    %c0_16 = arith.constant 0 : index
    %c0_17 = arith.constant 0 : index
    %35 = vector.load %arg6[%c0_15, %c0_16, %c0_17] : memref<2x16x128xf32, #tpu.memory_space<vmem>>, vector<2x16x128xf32>
    tpu.vector_store %arg6[%c0_15, %c0_16, %c0_17], %34 {strides = array<i32>} : memref<2x16x128xf32, #tpu.memory_space<vmem>>, vector<2x16x128xf32>,
    return
  }
  func.func @transform_0(%arg0: i32) -> (i32, i32, i32) {
    %c0_i32 = arith.constant 0 : i32
    %c0_i32_0 = arith.constant 0 : i32
    %c0_i32_1 = arith.constant 0 : i32
    return %arg0, %c0_i32, %c0_i32_0 : i32, i32, i32
  }
  func.func @transform_1(%arg0: i32) -> (i32, i32) {
    %c0_i32 = arith.constant 0 : i32
    %c0_i32_0 = arith.constant 0 : i32
    %c0_i32_1 = arith.constant 0 : i32
    return %c0_i32, %c0_i32_0 : i32, i32
  }
  func.func @transform_2(%arg0: i32) -> (i32, i32) {
    %c0_i32 = arith.constant 0 : i32
    %c0_i32_0 = arith.constant 0 : i32
    %c0_i32_1 = arith.constant 0 : i32
    return %c0_i32, %c0_i32_0 : i32, i32
  }
  func.func @transform_3(%arg0: i32) -> (i32, i32) {
    %c0_i32 = arith.constant 0 : i32
    %c0_i32_0 = arith.constant 0 : i32
    %c0_i32_1 = arith.constant 0 : i32
    return %c0_i32, %c0_i32_0 : i32, i32
  }
  func.func @transform_4(%arg0: i32) -> (i32, i32) {
    %c0_i32 = arith.constant 0 : i32
    %c0_i32_0 = arith.constant 0 : i32
    %c0_i32_1 = arith.constant 0 : i32
    return %c0_i32, %c0_i32_0 : i32, i32
  }
  func.func @transform_5(%arg0: i32) -> (i32, i32, i32) {
    %c0_i32 = arith.constant 0 : i32
    %c0_i32_0 = arith.constant 0 : i32
    %c0_i32_1 = arith.constant 0 : i32
    return %arg0, %c0_i32, %c0_i32_0 : i32, i32, i32
  }
}

</mosaic_0001>

<llo_original>
// kernel: tpu_custom_call.1
$region0: #{tpu_custom_call.1}
  #allocation0 [shape = 'u32[]', space=smem, size = 0x4, offset = 0x4, fixed_abs, tag = 'smem constant byte address 0x4 - core index']
  #allocation1 [shape = 'u32[72,128]{1,0:T(1,128)}', space=vmem, size = 0x9000, scoped, tag = 'internal scratch']
  %s0 = inlined_call_operand.hbm [shape: f32[2,16,128], index: 0, kind: input, shape index: {}]
  %s1 = inlined_call_operand.hbm [shape: bf16[384,128], index: 1, kind: input, shape index: {}]
  %s2 = inlined_call_operand.vmem [shape: f32[1,128], index: 2, kind: input, shape index: {}]
  %s3 = inlined_call_operand.hbm [shape: bf16[384,128], index: 3, kind: input, shape index: {}]
  %s4 = inlined_call_operand.vmem [shape: f32[1,128], index: 4, kind: input, shape index: {}]
  %s5 = inlined_call_operand.hbm [shape: f32[2,16,128], index: 5, kind: output, shape index: {}]
  %s6 = sld [smem:[#allocation0]]
  $region42: #{tpu_custom_call.1} parent=0
    _
  %s8 = ssub.s32 1, %s6
  %s9 = scalar_select 0, %s8, %s6
  $region1: #{tpu_custom_call.1} parent=0
    #allocation2 [shape = 'u8[16384]{0}', space=vmem, size = 0x4000, scoped, tag = 'input window, operand 0, single buffered']
    #allocation3 [shape = 's32[1]{0}', space=sflag, size = 0x4, scoped, tag = 'scoped memory for tpu_custom_call.1']
    #allocation4 [shape = 's32[1]{0}', space=sflag, size = 0x4, scoped, tag = 'scoped memory for tpu_custom_call.1']
    #allocation5 [shape = 'u8[98304]{0}', space=vmem, size = 0x18000, scoped, tag = 'input window, operand 1, single buffered']
    #allocation6 [shape = 's32[1]{0}', space=sflag, size = 0x4, scoped, tag = 'scoped memory for tpu_custom_call.1']
    #allocation7 [shape = 'u8[98304]{0}', space=vmem, size = 0x18000, scoped, tag = 'input window, operand 3, single buffered']
    #allocation8 [shape = 'u8[16384]{0}', space=vmem, size = 0x4000, scoped, tag = 'output window, operand 0, single buffered']
    %10 = vsyncpa [#allocation3], 0
    %11 = vsyncpa [#allocation6], 0
    %12 = vsyncpa [#allocation4], 0
    // Predicated region
    $region2: #{tpu_custom_call.1} parent=1 // pred_check
      _
    $region3: #{tpu_custom_call.1} parent=1 // pred_check_branch
      %14 = sbr.rel (0) target = $region5
    $region4: #{tpu_custom_call.1} parent=1 // pred_region
      %16 = vsyncadd [#allocation3], 0
      %s17 = sshll.u32 %s0, 4
      %s18 = int_to_ptr.hbm [resolvable:$true] %s17
      %s19 = sshll.u32 [#allocation2], 4
      %s20 = int_to_ptr.vmem [resolvable:$true] %s19
      %25 = dma.hbm_to_vmem [thread:$0]  %s18, 512, %s20, [#allocation3], 128, 128, 8
    $region5: #{tpu_custom_call.1} parent=1 // pred_fallthru
      _
    // Predicated region
    $region6: #{tpu_custom_call.1} parent=1 // pred_check
      _
    $region7: #{tpu_custom_call.1} parent=1 // pred_check_branch
      %27 = sbr.rel (0) target = $region9
    $region8: #{tpu_custom_call.1} parent=1 // pred_region
      %29 = vsyncadd [#allocation6], 0
      %s30 = sshll.u32 %s1, 4
      %s31 = int_to_ptr.hbm [resolvable:$true] %s30
      %s32 = sshll.u32 [#allocation5], 4
      %s33 = int_to_ptr.vmem [resolvable:$true] %s32
      %38 = dma.hbm_to_vmem [thread:$0]  %s31, 3072, %s33, [#allocation6], 64, 64, 4
    $region9: #{tpu_custom_call.1} parent=1 // pred_fallthru
      _
    // Predicated region
    $region10: #{tpu_custom_call.1} parent=1 // pred_check
      _
    $region11: #{tpu_custom_call.1} parent=1 // pred_check_branch
      %40 = sbr.rel (0) target = $region13
    $region12: #{tpu_custom_call.1} parent=1 // pred_region
      _
    $region13: #{tpu_custom_call.1} parent=1 // pred_fallthru
      _
    // Predicated region
    $region14: #{tpu_custom_call.1} parent=1 // pred_check
      _
    $region15: #{tpu_custom_call.1} parent=1 // pred_check_branch
      %42 = sbr.rel (0) target = $region17
    $region16: #{tpu_custom_call.1} parent=1 // pred_region
      %44 = vsyncadd [#allocation6], 0
      %s45 = sshll.u32 %s3, 4
      %s46 = int_to_ptr.hbm [resolvable:$true] %s45
      %s47 = sshll.u32 [#allocation7], 4
      %s48 = int_to_ptr.vmem [resolvable:$true] %s47
      %53 = dma.hbm_to_vmem [thread:$0]  %s46, 3072, %s48, [#allocation6], 64, 64, 4
    $region17: #{tpu_custom_call.1} parent=1 // pred_fallthru
      _
    // Predicated region
    $region18: #{tpu_custom_call.1} parent=1 // pred_check
      _
    $region19: #{tpu_custom_call.1} parent=1 // pred_check_branch
      %55 = sbr.rel (0) target = $region21
    $region20: #{tpu_custom_call.1} parent=1 // pred_region
      _
    $region21: #{tpu_custom_call.1} parent=1 // pred_fallthru
      _
    // Predicated region
    $region22: #{tpu_custom_call.1} parent=1 // pred_check
      _
    $region23: #{tpu_custom_call.1} parent=1 // pred_check_branch
      %57 = sbr.rel (0) target = $region25
    $region24: #{tpu_custom_call.1} parent=1 // pred_region
      %59 = dma.done [#allocation3], 512
    $region25: #{tpu_custom_call.1} parent=1 // pred_fallthru
      _
    // Predicated region
    $region26: #{tpu_custom_call.1} parent=1 // pred_check
      _
    $region27: #{tpu_custom_call.1} parent=1 // pred_check_branch
      %61 = sbr.rel (0) target = $region29
    $region28: #{tpu_custom_call.1} parent=1 // pred_region
      %63 = dma.done [#allocation6], 3072
    $region29: #{tpu_custom_call.1} parent=1 // pred_fallthru
      _
    // Predicated region
    $region30: #{tpu_custom_call.1} parent=1 // pred_check
      _
    $region31: #{tpu_custom_call.1} parent=1 // pred_check_branch
      %65 = sbr.rel (0) target = $region33
    $region32: #{tpu_custom_call.1} parent=1 // pred_region
      %67 = dma.done [#allocation6], 3072
    $region33: #{tpu_custom_call.1} parent=1 // pred_fallthru
      _
    %v68 = vld [vmem:[#allocation2] sm:$0xff]
    %v69 = vld [vmem:[#allocation2 + $0x8] sm:$0xff]
    %v70 = vld [vmem:[#allocation2 + $0x10] sm:$0xff]
    %v71 = vld [vmem:[#allocation2 + $0x18] sm:$0xff]
    %vm76 = vcmask 1040384
    %v77 = vrot.slane %v68, 7
    %v78 = vrot.slane %v69, 7
    %v79 = vsel %vm76, %v77, %v78
    %v80 = vrot.slane %v70, 7
    %v81 = vrot.slane %v71, 7
    %v82 = vsel %vm76, %v80, %v81
    %v87 = vsel %vm76, 0.0, %v77
    %v88 = vsel %vm76, 0.0, %v80
    %vm89 = vcmask 1046528
    %v90 = vrot.slane %v68, 1
    %v91 = vrot.slane %v69, 1
    %v92 = vsel %vm89, %v90, %v91
    %v93 = vrot.slane %v70, 1
    %v94 = vrot.slane %v71, 1
    %v95 = vsel %vm89, %v93, %v94
    %v100 = vsel %vm89, %v91, 0.0
    %v101 = vsel %vm89, %v94, 0.0
    %v102 = vpack.c.bf16 %v79, %v87
    %v103 = vpack.c.bf16 %v69, %v68
    %v104 = vpack.c.bf16 %v100, %v92
    %v105 = vpack.c.bf16 %v82, %v88
    %v106 = vpack.c.bf16 %v71, %v70
    %v107 = vpack.c.bf16 %v101, %v95
    %v108 = vld [vmem:[#allocation5] sm:$0xf]
    %v109 = vld [vmem:[#allocation5 + $0x4] sm:$0xf]
    %v110 = vld [vmem:[#allocation5 + $0x8] sm:$0xf]
    %v111 = vld [vmem:[#allocation5 + $0xc] sm:$0xf]
    %v112 = vld [vmem:[#allocation5 + $0x10] sm:$0xf]
    %v113 = vld [vmem:[#allocation5 + $0x14] sm:$0xf]
    %v114 = vld [vmem:[#allocation5 + $0x18] sm:$0xf]
    %v115 = vld [vmem:[#allocation5 + $0x1c] sm:$0xf]
    %v116 = vld [vmem:[#allocation5 + $0x20] sm:$0xf]
    %v117 = vld [vmem:[#allocation5 + $0x24] sm:$0xf]
    %v118 = vld [vmem:[#allocation5 + $0x28] sm:$0xf]
    %v119 = vld [vmem:[#allocation5 + $0x2c] sm:$0xf]
    %v120 = vld [vmem:[#allocation5 + $0x30] sm:$0xf]
    %v121 = vld [vmem:[#allocation5 + $0x34] sm:$0xf]
    %v122 = vld [vmem:[#allocation5 + $0x38] sm:$0xf]
    %v123 = vld [vmem:[#allocation5 + $0x3c] sm:$0xf]
    %v124 = vld [vmem:[#allocation5 + $0x40] sm:$0xf]
    %v125 = vld [vmem:[#allocation5 + $0x44] sm:$0xf]
    %v126 = vld [vmem:[#allocation5 + $0x48] sm:$0xf]
    %v127 = vld [vmem:[#allocation5 + $0x4c] sm:$0xf]
    %v128 = vld [vmem:[#allocation5 + $0x50] sm:$0xf]
    %v129 = vld [vmem:[#allocation5 + $0x54] sm:$0xf]
    %v130 = vld [vmem:[#allocation5 + $0x58] sm:$0xf]
    %v131 = vld [vmem:[#allocation5 + $0x5c] sm:$0xf]
    %v132 = vld [vmem:[#allocation5 + $0x60] sm:$0xf]
    %v133 = vld [vmem:[#allocation5 + $0x64] sm:$0xf]
    %v134 = vld [vmem:[#allocation5 + $0x68] sm:$0xf]
    %v135 = vld [vmem:[#allocation5 + $0x6c] sm:$0xf]
    %v136 = vld [vmem:[#allocation5 + $0x70] sm:$0xf]
    %v137 = vld [vmem:[#allocation5 + $0x74] sm:$0xf]
    %v138 = vld [vmem:[#allocation5 + $0x78] sm:$0xf]
    %v139 = vld [vmem:[#allocation5 + $0x7c] sm:$0xf]
    %v140 = vld [vmem:[#allocation5 + $0x80] sm:$0xf]
    %v141 = vld [vmem:[#allocation5 + $0x84] sm:$0xf]
    %v142 = vld [vmem:[#allocation5 + $0x88] sm:$0xf]
    %v143 = vld [vmem:[#allocation5 + $0x8c] sm:$0xf]
    %v144 = vld [vmem:[#allocation5 + $0x90] sm:$0xf]
    %v145 = vld [vmem:[#allocation5 + $0x94] sm:$0xf]
    %v146 = vld [vmem:[#allocation5 + $0x98] sm:$0xf]
    %v147 = vld [vmem:[#allocation5 + $0x9c] sm:$0xf]
    %v148 = vld [vmem:[#allocation5 + $0xa0] sm:$0xf]
    %v149 = vld [vmem:[#allocation5 + $0xa4] sm:$0xf]
    %v150 = vld [vmem:[#allocation5 + $0xa8] sm:$0xf]
    %v151 = vld [vmem:[#allocation5 + $0xac] sm:$0xf]
    %v152 = vld [vmem:[#allocation5 + $0xb0] sm:$0xf]
    %v153 = vld [vmem:[#allocation5 + $0xb4] sm:$0xf]
    %v154 = vld [vmem:[#allocation5 + $0xb8] sm:$0xf]
    %v155 = vld [vmem:[#allocation5 + $0xbc] sm:$0xf]
    %v156 = vld [vmem:[%s2] sm:$0x1]
    %v158 = vperm.slane %v156, 0
    %v208 = vunpack.c.l.b16 %v108
    %v209 = vunpack.c.l.b16 %v109
    %v210 = vunpack.c.l.b16 %v110
    %v211 = vunpack.c.l.b16 %v111
    %v212 = vunpack.c.l.b16 %v112
    %v213 = vunpack.c.l.b16 %v113
    %v214 = vunpack.c.l.b16 %v114
    %v215 = vunpack.c.l.b16 %v115
    %v216 = vunpack.c.l.b16 %v116
    %v217 = vunpack.c.l.b16 %v117
    %v218 = vunpack.c.l.b16 %v118
    %v219 = vunpack.c.l.b16 %v119
    %v220 = vunpack.c.l.b16 %v120
    %v221 = vunpack.c.l.b16 %v121
    %v222 = vunpack.c.l.b16 %v122
    %v223 = vunpack.c.l.b16 %v123
    %v224 = vunpack.c.l.b16 %v124
    %v225 = vunpack.c.l.b16 %v125
    %v226 = vunpack.c.l.b16 %v126
    %v227 = vunpack.c.l.b16 %v127
    %v228 = vunpack.c.l.b16 %v128
    %v229 = vunpack.c.l.b16 %v129
    %v230 = vunpack.c.l.b16 %v130
    %v231 = vunpack.c.l.b16 %v131
    %v232 = vunpack.c.l.b16 %v132
    %v233 = vunpack.c.l.b16 %v133
    %v234 = vunpack.c.l.b16 %v134
    %v235 = vunpack.c.l.b16 %v135
    %v236 = vunpack.c.l.b16 %v136
    %v237 = vunpack.c.l.b16 %v137
    %v238 = vunpack.c.l.b16 %v138
    %v239 = vunpack.c.l.b16 %v139
    %v240 = vunpack.c.l.b16 %v140
    %v241 = vunpack.c.l.b16 %v141
    %v242 = vunpack.c.l.b16 %v142
    %v243 = vunpack.c.l.b16 %v143
    %v244 = vunpack.c.l.b16 %v144
    %v245 = vunpack.c.l.b16 %v145
    %v246 = vunpack.c.l.b16 %v146
    %v247 = vunpack.c.l.b16 %v147
    %v248 = vunpack.c.l.b16 %v148
    %v249 = vunpack.c.l.b16 %v149
    %v250 = vunpack.c.l.b16 %v150
    %v251 = vunpack.c.l.b16 %v151
    %v252 = vunpack.c.l.b16 %v152
    %v253 = vunpack.c.l.b16 %v153
    %v254 = vunpack.c.l.b16 %v154
    %v255 = vunpack.c.l.b16 %v155
    %v256 = vpack.c.b16 %v209, %v208
    %v257 = vpack.c.b16 %v211, %v210
    %v258 = vpack.c.b16 %v213, %v212
    %v259 = vpack.c.b16 %v215, %v214
    %v260 = vpack.c.b16 %v217, %v216
    %v261 = vpack.c.b16 %v219, %v218
    %v262 = vpack.c.b16 %v221, %v220
    %v263 = vpack.c.b16 %v223, %v222
    %v264 = vpack.c.b16 %v225, %v224
    %v265 = vpack.c.b16 %v227, %v226
    %v266 = vpack.c.b16 %v229, %v228
    %v267 = vpack.c.b16 %v231, %v230
    %v268 = vpack.c.b16 %v233, %v232
    %v269 = vpack.c.b16 %v235, %v234
    %v270 = vpack.c.b16 %v237, %v236
    %v271 = vpack.c.b16 %v239, %v238
    %v272 = vpack.c.b16 %v241, %v240
    %v273 = vpack.c.b16 %v243, %v242
    %v274 = vpack.c.b16 %v245, %v244
    %v275 = vpack.c.b16 %v247, %v246
    %v276 = vpack.c.b16 %v249, %v248
    %v277 = vpack.c.b16 %v251, %v250
    %v278 = vpack.c.b16 %v253, %v252
    %v279 = vpack.c.b16 %v255, %v254
    %304 = vmatpush.bf16.msra.mxu0 %v263
    %305 = vmatpush.bf16.msra.mxu0 %v262
    %306 = vmatpush.bf16.msra.mxu0 %v261
    %307 = vmatpush.bf16.msra.mxu0 %v260
    %308 = vmatpush.bf16.msra.mxu0 %v259
    %309 = vmatpush.bf16.msra.mxu0 %v258
    %310 = vmatpush.bf16.msra.mxu0 %v257
    %311 = vmatpush.bf16.msra.mxu0 %v256
    %312 = vmatmul.bf16.gmra.mxu0 %v102
    %v313 = vpop.f32.mrf.mxu0
    %v314 = vadd.f32 %v158, %v313
    %v315 = vpop.f32.mrf.mxu0
    %v316 = vadd.f32 %v158, %v315
    %317 = vmatmul.bf16.gmra.mxu0 %v105
    %v318 = vpop.f32.mrf.mxu0
    %v319 = vadd.f32 %v158, %v318
    %v320 = vpop.f32.mrf.mxu0
    %v321 = vadd.f32 %v158, %v320
    %322 = vdwg.mxu0
    %323 = vmatpush.bf16.msra.mxu0 %v271
    %324 = vmatpush.bf16.msra.mxu0 %v270
    %325 = vmatpush.bf16.msra.mxu0 %v269
    %326 = vmatpush.bf16.msra.mxu0 %v268
    %327 = vmatpush.bf16.msra.mxu0 %v267
    %328 = vmatpush.bf16.msra.mxu0 %v266
    %329 = vmatpush.bf16.msra.mxu0 %v265
    %330 = vmatpush.bf16.msra.mxu0 %v264
    %331 = vmatmul.bf16.gmra.mxu0 %v103
    %v332 = vpop.f32.mrf.mxu0
    %v333 = vadd.f32 %v314, %v332
    %v334 = vpop.f32.mrf.mxu0
    %v335 = vadd.f32 %v316, %v334
    %336 = vmatmul.bf16.gmra.mxu0 %v106
    %v337 = vpop.f32.mrf.mxu0
    %v338 = vadd.f32 %v319, %v337
    %v339 = vpop.f32.mrf.mxu0
    %v340 = vadd.f32 %v321, %v339
    %341 = vdwg.mxu0
    %342 = vmatpush.bf16.msra.mxu0 %v279
    %343 = vmatpush.bf16.msra.mxu0 %v278
    %344 = vmatpush.bf16.msra.mxu0 %v277
    %345 = vmatpush.bf16.msra.mxu0 %v276
    %346 = vmatpush.bf16.msra.mxu0 %v275
    %347 = vmatpush.bf16.msra.mxu0 %v274
    %348 = vmatpush.bf16.msra.mxu0 %v273
    %349 = vmatpush.bf16.msra.mxu0 %v272
    %350 = vmatmul.bf16.gmra.mxu0 %v104
    %v351 = vpop.f32.mrf.mxu0
    %v352 = vadd.f32 %v333, %v351
    %v353 = vpop.f32.mrf.mxu0
    %v354 = vadd.f32 %v335, %v353
    %355 = vmatmul.bf16.gmra.mxu0 %v107
    %v356 = vpop.f32.mrf.mxu0
    %v357 = vadd.f32 %v338, %v356
    %v358 = vpop.f32.mrf.mxu0
    %v359 = vadd.f32 %v340, %v358
    %360 = vdwg.mxu0
    %v361 = vmax.f32 %v352, 0.0
    %v362 = vmax.f32 %v354, 0.0
    %v363 = vmax.f32 %v357, 0.0
    %v364 = vmax.f32 %v359, 0.0
    %v369 = vrot.slane %v361, 7
    %v370 = vrot.slane %v362, 7
    %v371 = vsel %vm76, %v369, %v370
    %v372 = vrot.slane %v363, 7
    %v373 = vrot.slane %v364, 7
    %v374 = vsel %vm76, %v372, %v373
    %v379 = vsel %vm76, 0.0, %v369
    %v380 = vsel %vm76, 0.0, %v372
    %v381 = vrot.slane %v361, 1
    %v382 = vrot.slane %v362, 1
    %v383 = vsel %vm89, %v381, %v382
    %v384 = vrot.slane %v363, 1
    %v385 = vrot.slane %v364, 1
    %v386 = vsel %vm89, %v384, %v385
    %v391 = vsel %vm89, %v382, 0.0
    %v392 = vsel %vm89, %v385, 0.0
    %v393 = vpack.c.bf16 %v371, %v379
    %v394 = vpack.c.bf16 %v362, %v361
    %v395 = vpack.c.bf16 %v391, %v383
    %v396 = vpack.c.bf16 %v374, %v380
    %v397 = vpack.c.bf16 %v364, %v363
    %v398 = vpack.c.bf16 %v392, %v386
    %v399 = vld [vmem:[#allocation7] sm:$0xf]
    %v400 = vld [vmem:[#allocation7 + $0x4] sm:$0xf]
    %v401 = vld [vmem:[#allocation7 + $0x8] sm:$0xf]
    %v402 = vld [vmem:[#allocation7 + $0xc] sm:$0xf]
    %v403 = vld [vmem:[#allocation7 + $0x10] sm:$0xf]
    %v404 = vld [vmem:[#allocation7 + $0x14] sm:$0xf]
    %v405 = vld [vmem:[#allocation7 + $0x18] sm:$0xf]
    %v406 = vld [vmem:[#allocation7 + $0x1c] sm:$0xf]
    %v407 = vld [vmem:[#allocation7 + $0x20] sm:$0xf]
    %v408 = vld [vmem:[#allocation7 + $0x24] sm:$0xf]
    %v409 = vld [vmem:[#allocation7 + $0x28] sm:$0xf]
    %v410 = vld [vmem:[#allocation7 + $0x2c] sm:$0xf]
    %v411 = vld [vmem:[#allocation7 + $0x30] sm:$0xf]
    %v412 = vld [vmem:[#allocation7 + $0x34] sm:$0xf]
    %v413 = vld [vmem:[#allocation7 + $0x38] sm:$0xf]
    %v414 = vld [vmem:[#allocation7 + $0x3c] sm:$0xf]
    %v415 = vld [vmem:[#allocation7 + $0x40] sm:$0xf]
    %v416 = vld [vmem:[#allocation7 + $0x44] sm:$0xf]
    %v417 = vld [vmem:[#allocation7 + $0x48] sm:$0xf]
    %v418 = vld [vmem:[#allocation7 + $0x4c] sm:$0xf]
    %v419 = vld [vmem:[#allocation7 + $0x50] sm:$0xf]
    %v420 = vld [vmem:[#allocation7 + $0x54] sm:$0xf]
    %v421 = vld [vmem:[#allocation7 + $0x58] sm:$0xf]
    %v422 = vld [vmem:[#allocation7 + $0x5c] sm:$0xf]
    %v423 = vld [vmem:[#allocation7 + $0x60] sm:$0xf]
    %v424 = vld [vmem:[#allocation7 + $0x64] sm:$0xf]
    %v425 = vld [vmem:[#allocation7 + $0x68] sm:$0xf]
    %v426 = vld [vmem:[#allocation7 + $0x6c] sm:$0xf]
    %v427 = vld [vmem:[#allocation7 + $0x70] sm:$0xf]
    %v428 = vld [vmem:[#allocation7 + $0x74] sm:$0xf]
    %v429 = vld [vmem:[#allocation7 + $0x78] sm:$0xf]
    %v430 = vld [vmem:[#allocation7 + $0x7c] sm:$0xf]
    %v431 = vld [vmem:[#allocation7 + $0x80] sm:$0xf]
    %v432 = vld [vmem:[#allocation7 + $0x84] sm:$0xf]
    %v433 = vld [vmem:[#allocation7 + $0x88] sm:$0xf]
    %v434 = vld [vmem:[#allocation7 + $0x8c] sm:$0xf]
    %v435 = vld [vmem:[#allocation7 + $0x90] sm:$0xf]
    %v436 = vld [vmem:[#allocation7 + $0x94] sm:$0xf]
    %v437 = vld [vmem:[#allocation7 + $0x98] sm:$0xf]
    %v438 = vld [vmem:[#allocation7 + $0x9c] sm:$0xf]
    %v439 = vld [vmem:[#allocation7 + $0xa0] sm:$0xf]
    %v440 = vld [vmem:[#allocation7 + $0xa4] sm:$0xf]
    %v441 = vld [vmem:[#allocation7 + $0xa8] sm:$0xf]
    %v442 = vld [vmem:[#allocation7 + $0xac] sm:$0xf]
    %v443 = vld [vmem:[#allocation7 + $0xb0] sm:$0xf]
    %v444 = vld [vmem:[#allocation7 + $0xb4] sm:$0xf]
    %v445 = vld [vmem:[#allocation7 + $0xb8] sm:$0xf]
    %v446 = vld [vmem:[#allocation7 + $0xbc] sm:$0xf]
    %v447 = vld [vmem:[%s4] sm:$0x1]
    %v449 = vperm.slane %v447, 0
    %v499 = vunpack.c.l.b16 %v399
    %v500 = vunpack.c.l.b16 %v400
    %v501 = vunpack.c.l.b16 %v401
    %v502 = vunpack.c.l.b16 %v402
    %v503 = vunpack.c.l.b16 %v403
    %v504 = vunpack.c.l.b16 %v404
    %v505 = vunpack.c.l.b16 %v405
    %v506 = vunpack.c.l.b16 %v406
    %v507 = vunpack.c.l.b16 %v407
    %v508 = vunpack.c.l.b16 %v408
    %v509 = vunpack.c.l.b16 %v409
    %v510 = vunpack.c.l.b16 %v410
    %v511 = vunpack.c.l.b16 %v411
    %v512 = vunpack.c.l.b16 %v412
    %v513 = vunpack.c.l.b16 %v413
    %v514 = vunpack.c.l.b16 %v414
    %v515 = vunpack.c.l.b16 %v415
    %v516 = vunpack.c.l.b16 %v416
    %v517 = vunpack.c.l.b16 %v417
    %v518 = vunpack.c.l.b16 %v418
    %v519 = vunpack.c.l.b16 %v419
    %v520 = vunpack.c.l.b16 %v420
    %v521 = vunpack.c.l.b16 %v421
    %v522 = vunpack.c.l.b16 %v422
    %v523 = vunpack.c.l.b16 %v423
    %v524 = vunpack.c.l.b16 %v424
    %v525 = vunpack.c.l.b16 %v425
    %v526 = vunpack.c.l.b16 %v426
    %v527 = vunpack.c.l.b16 %v427
    %v528 = vunpack.c.l.b16 %v428
    %v529 = vunpack.c.l.b16 %v429
    %v530 = vunpack.c.l.b16 %v430
    %v531 = vunpack.c.l.b16 %v431
    %v532 = vunpack.c.l.b16 %v432
    %v533 = vunpack.c.l.b16 %v433
    %v534 = vunpack.c.l.b16 %v434
    %v535 = vunpack.c.l.b16 %v435
    %v536 = vunpack.c.l.b16 %v436
    %v537 = vunpack.c.l.b16 %v437
    %v538 = vunpack.c.l.b16 %v438
    %v539 = vunpack.c.l.b16 %v439
    %v540 = vunpack.c.l.b16 %v440
    %v541 = vunpack.c.l.b16 %v441
    %v542 = vunpack.c.l.b16 %v442
    %v543 = vunpack.c.l.b16 %v443
    %v544 = vunpack.c.l.b16 %v444
    %v545 = vunpack.c.l.b16 %v445
    %v546 = vunpack.c.l.b16 %v446
    %v547 = vpack.c.b16 %v500, %v499
    %v548 = vpack.c.b16 %v502, %v501
    %v549 = vpack.c.b16 %v504, %v503
    %v550 = vpack.c.b16 %v506, %v505
    %v551 = vpack.c.b16 %v508, %v507
    %v552 = vpack.c.b16 %v510, %v509
    %v553 = vpack.c.b16 %v512, %v511
    %v554 = vpack.c.b16 %v514, %v513
    %v555 = vpack.c.b16 %v516, %v515
    %v556 = vpack.c.b16 %v518, %v517
    %v557 = vpack.c.b16 %v520, %v519
    %v558 = vpack.c.b16 %v522, %v521
    %v559 = vpack.c.b16 %v524, %v523
    %v560 = vpack.c.b16 %v526, %v525
    %v561 = vpack.c.b16 %v528, %v527
    %v562 = vpack.c.b16 %v530, %v529
    %v563 = vpack.c.b16 %v532, %v531
    %v564 = vpack.c.b16 %v534, %v533
    %v565 = vpack.c.b16 %v536, %v535
    %v566 = vpack.c.b16 %v538, %v537
    %v567 = vpack.c.b16 %v540, %v539
    %v568 = vpack.c.b16 %v542, %v541
    %v569 = vpack.c.b16 %v544, %v543
    %v570 = vpack.c.b16 %v546, %v545
    %595 = vmatpush.bf16.msra.mxu0 %v554
    %596 = vmatpush.bf16.msra.mxu0 %v553
    %597 = vmatpush.bf16.msra.mxu0 %v552
    %598 = vmatpush.bf16.msra.mxu0 %v551
    %599 = vmatpush.bf16.msra.mxu0 %v550
    %600 = vmatpush.bf16.msra.mxu0 %v549
    %601 = vmatpush.bf16.msra.mxu0 %v548
    %602 = vmatpush.bf16.msra.mxu0 %v547
    %603 = vmatmul.bf16.gmra.mxu0 %v393
    %v604 = vpop.f32.mrf.mxu0
    %v605 = vadd.f32 %v449, %v604
    %v606 = vpop.f32.mrf.mxu0
    %v607 = vadd.f32 %v449, %v606
    %608 = vmatmul.bf16.gmra.mxu0 %v396
    %v609 = vpop.f32.mrf.mxu0
    %v610 = vadd.f32 %v449, %v609
    %v611 = vpop.f32.mrf.mxu0
    %v612 = vadd.f32 %v449, %v611
    %613 = vdwg.mxu0
    %614 = vmatpush.bf16.msra.mxu0 %v562
    %615 = vmatpush.bf16.msra.mxu0 %v561
    %616 = vmatpush.bf16.msra.mxu0 %v560
    %617 = vmatpush.bf16.msra.mxu0 %v559
    %618 = vmatpush.bf16.msra.mxu0 %v558
    %619 = vmatpush.bf16.msra.mxu0 %v557
    %620 = vmatpush.bf16.msra.mxu0 %v556
    %621 = vmatpush.bf16.msra.mxu0 %v555
    %622 = vmatmul.bf16.gmra.mxu0 %v394
    %v623 = vpop.f32.mrf.mxu0
    %v624 = vadd.f32 %v605, %v623
    %v625 = vpop.f32.mrf.mxu0
    %v626 = vadd.f32 %v607, %v625
    %627 = vmatmul.bf16.gmra.mxu0 %v397
    %v628 = vpop.f32.mrf.mxu0
    %v629 = vadd.f32 %v610, %v628
    %v630 = vpop.f32.mrf.mxu0
    %v631 = vadd.f32 %v612, %v630
    %632 = vdwg.mxu0
    %633 = vmatpush.bf16.msra.mxu0 %v570
    %634 = vmatpush.bf16.msra.mxu0 %v569
    %635 = vmatpush.bf16.msra.mxu0 %v568
    %636 = vmatpush.bf16.msra.mxu0 %v567
    %637 = vmatpush.bf16.msra.mxu0 %v566
    %638 = vmatpush.bf16.msra.mxu0 %v565
    %639 = vmatpush.bf16.msra.mxu0 %v564
    %640 = vmatpush.bf16.msra.mxu0 %v563
    %641 = vmatmul.bf16.gmra.mxu0 %v395
    %v642 = vpop.f32.mrf.mxu0
    %v643 = vadd.f32 %v624, %v642
    %v644 = vpop.f32.mrf.mxu0
    %v645 = vadd.f32 %v626, %v644
    %646 = vmatmul.bf16.gmra.mxu0 %v398
    %v647 = vpop.f32.mrf.mxu0
    %v648 = vadd.f32 %v629, %v647
    %v649 = vpop.f32.mrf.mxu0
    %v650 = vadd.f32 %v631, %v649
    %651 = vdwg.mxu0
    %v652 = vadd.f32 %v643, %v68
    %v653 = vadd.f32 %v645, %v69
    %v654 = vadd.f32 %v648, %v70
    %v655 = vadd.f32 %v650, %v71
    %v656 = vmax.f32 %v652, 0.0
    %v657 = vmax.f32 %v653, 0.0
    %v658 = vmax.f32 %v654, 0.0
    %v659 = vmax.f32 %v655, 0.0
    %660 = vst [vmem:[#allocation8] sm:$0xff] %v656
    %661 = vst [vmem:[#allocation8 + $0x8] sm:$0xff] %v657
    %662 = vst [vmem:[#allocation8 + $0x10] sm:$0xff] %v658
    %663 = vst [vmem:[#allocation8 + $0x18] sm:$0xff] %v659
    // Predicated region
    $region34: #{tpu_custom_call.1} parent=1 // pred_check
      _
    $region35: #{tpu_custom_call.1} parent=1 // pred_check_branch
      %665 = sbr.rel (0) target = $region37
    $region36: #{tpu_custom_call.1} parent=1 // pred_region
      %667 = vsyncadd [#allocation4], 0
      %s668 = sshll.u32 [#allocation8], 4
      %s669 = int_to_ptr.vmem [resolvable:$true] %s668
      %s670 = sshll.u32 %s5, 4
      %s671 = int_to_ptr.hbm [resolvable:$true] %s670
      %676 = dma.vmem_to_hbm [thread:$0]  %s669, 512, %s671, [#allocation4], 128, 128, 8
    $region37: #{tpu_custom_call.1} parent=1 // pred_fallthru
      _
    // Predicated region
    $region38: #{tpu_custom_call.1} parent=1 // pred_check
      _
    $region39: #{tpu_custom_call.1} parent=1 // pred_check_branch
      %678 = sbr.rel (0) target = $region41
    $region40: #{tpu_custom_call.1} parent=1 // pred_region
      %680 = dma.done [#allocation4], 512
    $region41: #{tpu_custom_call.1} parent=1 // pred_fallthru
      _
    %681 = vsyncpa [#allocation3], 1
    %682 = vsyncpa [#allocation6], 1
    %683 = vsyncpa [#allocation4], 1

</llo_original>
